<compile_context>
chip_gen: v5e
topology: v5e:2x2
jax: 0.10.0
libtpu: 0.0.40
codegen_flags: <defaults>
</compile_context>

<pallas_src>
import math

import numpy as np

import jax
import jax.numpy as jnp
from jax.experimental import pallas as pl
from jax.experimental.pallas import tpu as pltpu


def _round_up(x: int, m: int) -> int:
    return (x + m - 1) // m * m


# ---------------------------------------------------------------------------
# Parameter packing
# ---------------------------------------------------------------------------
def pack_params(params, action_scale=1.0, action_bias=0.0):
    """Pack weights into one bf16 slab and biases/affine into one f32 slab.

    Weights are stored (in, out) so the kernel computes x @ W directly.
    Every weight segment starts at a sublane-aligned row (multiple of 8) and
    lane 0, with lane widths padded to multiples of 128 -> unmasked aligned
    reads and MXU-friendly K/N.
    """
    w1, b1 = params["w1"], params["b1"]
    w2, b2 = params["w2"], params["b2"]
    wm, bm = params["wm"], params["bm"]

    num_inputs, H = w1.shape
    A = wm.shape[1]

    K_pad = _round_up(num_inputs, 8)
    H_pad = _round_up(H, 128)
    A_pad = _round_up(A, 128)
    W = max(H_pad, A_pad)

    r_w1, r_w2, r_wm = 0, K_pad, K_pad + H_pad
    R = K_pad + 2 * H_pad

    wslab = jnp.zeros((R, W), jnp.float32)
    wslab = wslab.at[r_w1:r_w1 + num_inputs, 0:H].set(w1)
    wslab = wslab.at[r_w2:r_w2 + H, 0:H].set(w2)
    wslab = wslab.at[r_wm:r_wm + H, 0:A].set(wm)
    wslab = wslab.astype(jnp.bfloat16)            # native MXU operand dtype

    # f32 vector slab: b1 / b2 / bm / action_scale / action_bias (per-dim OK).
    scale = np.broadcast_to(np.asarray(action_scale, np.float32), (A,))
    bias = np.broadcast_to(np.asarray(action_bias, np.float32), (A,))
    affine_identity = bool(np.all(scale == 1.0) and np.all(bias == 0.0))

    vslab = jnp.zeros((8, W), jnp.float32)
    vslab = vslab.at[0, 0:H].set(jnp.reshape(b1, (-1,)))
    vslab = vslab.at[1, 0:H].set(jnp.reshape(b2, (-1,)))
    vslab = vslab.at[2, 0:A].set(jnp.reshape(bm, (-1,)))
    vslab = vslab.at[3, 0:A].set(jnp.asarray(scale))
    vslab = vslab.at[4, 0:A].set(jnp.asarray(bias))

    meta = dict(num_inputs=num_inputs, hidden_dim=H, num_actions=A,
                K_pad=K_pad, H_pad=H_pad, A_pad=A_pad,
                row_offsets=(r_w1, r_w2, r_wm),
                affine_identity=affine_identity)
    return wslab, vslab, meta


# ---------------------------------------------------------------------------
# Kernel
# ---------------------------------------------------------------------------
def _make_policy_kernel(K_pad, H_pad, A_pad, row_offsets, affine_identity,
                        out_lanes):
    r_w1, r_w2, r_wm = row_offsets

    def policy_kernel(w_ref, v_ref, x_ref, o_ref):
        # bf16 weight slices: 8-aligned sublane offsets, 128-multiple lanes.
        w1 = w_ref[r_w1:r_w1 + K_pad, 0:H_pad]
        w2 = w_ref[r_w2:r_w2 + H_pad, 0:H_pad]
        wm = w_ref[r_wm:r_wm + H_pad, 0:A_pad]
        # f32 bias rows.
        b1 = v_ref[0:1, 0:H_pad]
        b2 = v_ref[1:2, 0:H_pad]
        bm = v_ref[2:3, 0:A_pad]

        # bf16 MXU operands, f32 accumulation; VPU/EUP math stays f32.
        x = x_ref[...].astype(jnp.bfloat16)
        h1 = jnp.maximum(
            jnp.dot(x, w1, preferred_element_type=jnp.float32) + b1, 0.0)
        h2 = jnp.maximum(
            jnp.dot(h1.astype(jnp.bfloat16), w2,
                    preferred_element_type=jnp.float32) + b2, 0.0)
        m = jnp.tanh(
            jnp.dot(h2.astype(jnp.bfloat16), wm,
                    preferred_element_type=jnp.float32) + bm)

        if not affine_identity:                   # per-action-dim affine
            m = m * v_ref[3:4, 0:A_pad] + v_ref[4:5, 0:A_pad]

        if out_lanes == A_pad:
            o_ref[...] = m                        # lane-dense, unmasked vst
        else:
            o_ref[...] = m[:, 0:out_lanes]        # narrow, masked vst

    return policy_kernel


# ---------------------------------------------------------------------------
# Batch tile selection
# ---------------------------------------------------------------------------
def _choose_batch_tiling(B, K_pad, out_lanes, param_bytes, block_b,
                         vmem_budget_bytes):
    """Pick (tm, B_pad, steps): big tiles to amortize per-step overhead, at
    least 2 (even) steps when B is large enough (v7x dual-TC sharding), and a
    bounded double-buffered VMEM footprint."""
    if B < 16:
        return B, B, 1                            # too small to split usefully
    steps = max(2, -(-B // block_b))
    if steps % 2:
        steps += 1
    while True:
        tm = _round_up(-(-B // steps), 8)
        est = 2 * tm * (K_pad + out_lanes) * 4 + 2 * param_bytes
        if est <= vmem_budget_bytes or tm <= 64:
            break
        steps *= 2                                # stays even
    return tm, tm * steps, steps


# ---------------------------------------------------------------------------
# Wrapper
# ---------------------------------------------------------------------------
def deterministic_policy_forward(state, wslab, vslab, meta, *,
                                 block_b=4096, lane_dense_output=True,
                                 vmem_budget_bytes=24 << 20):
    """state: (B, num_inputs) float. Returns mean: (B, num_actions) f32."""
    B, num_inputs = state.shape
    assert num_inputs == meta["num_inputs"]
    K_pad, H_pad, A_pad = meta["K_pad"], meta["H_pad"], meta["A_pad"]
    A = meta["num_actions"]
    out_lanes = A_pad if lane_dense_output else A

    param_bytes = (wslab.size * wslab.dtype.itemsize
                   + vslab.size * vslab.dtype.itemsize)
    tm, B_pad, steps = _choose_batch_tiling(B, K_pad, out_lanes, param_bytes,
                                            block_b, vmem_budget_bytes)

    x = state.astype(jnp.float32)
    if B_pad != B or K_pad != num_inputs:
        x = jnp.pad(x, ((0, B_pad - B), (0, K_pad - num_inputs)))

    kernel = _make_policy_kernel(K_pad, H_pad, A_pad, meta["row_offsets"],
                                 meta["affine_identity"], out_lanes)

    cost = pl.CostEstimate(
        flops=2 * B_pad * (K_pad * H_pad + H_pad * H_pad + H_pad * A_pad),
        transcendentals=B_pad * A_pad,
        bytes_accessed=4 * B_pad * K_pad + param_bytes + 4 * B_pad * out_lanes,
    )

    out = pl.pallas_call(
        kernel,
        out_shape=jax.ShapeDtypeStruct((B_pad, out_lanes), jnp.float32),
        grid_spec=pl.GridSpec(
            grid=(steps,),
            in_specs=[
                # Parameter slabs: constant block index -> single DMA, kept
                # VMEM-resident across the batch grid (Mosaic skips re-DMA of
                # the revisited block; slabs are tiny).
                pl.BlockSpec(wslab.shape, lambda i: (0, 0)),
                pl.BlockSpec(vslab.shape, lambda i: (0, 0)),
                # State tiles pipeline over the 'parallel' batch axis.
                pl.BlockSpec((tm, K_pad), lambda i: (i, 0)),
            ],
            out_specs=pl.BlockSpec((tm, out_lanes), lambda i: (i, 0)),
        ),
        compiler_params=pltpu.CompilerParams(
            dimension_semantics=("parallel",),
            vmem_limit_bytes=32 << 20,            # explicit budget (v7x: 64 MiB phys)
        ),
        cost_estimate=cost,
    )(wslab, vslab, x)

    return out[:B, :A]


# ---------------------------------------------------------------------------
# Init + reference
# ---------------------------------------------------------------------------
def init_params(key, num_inputs, num_actions, hidden_dim):
    """Xavier-uniform (gain=1) weights, zero biases — mirrors weights_init_.
    Weights stored as (in, out)."""
    def xavier(k, fan_in, fan_out):
        limit = math.sqrt(6.0 / (fan_in + fan_out))
        return jax.random.uniform(k, (fan_in, fan_out), jnp.float32,
                                  minval=-limit, maxval=limit)

    k1, k2, k3 = jax.random.split(key, 3)
    return {
        "w1": xavier(k1, num_inputs, hidden_dim),
        "b1": jnp.zeros((1, hidden_dim), jnp.float32),
        "w2": xavier(k2, hidden_dim, hidden_dim),
        "b2": jnp.zeros((1, hidden_dim), jnp.float32),
        "wm": xavier(k3, hidden_dim, num_actions),
        "bm": jnp.zeros((1, num_actions), jnp.float32),
    }


def _reference_forward(state, params, action_scale=1.0, action_bias=0.0):
    h1 = jax.nn.relu(state @ params["w1"] + params["b1"])
    h2 = jax.nn.relu(h1 @ params["w2"] + params["b2"])
    mean = jnp.tanh(h2 @ params["wm"] + params["bm"])
    return mean * jnp.asarray(action_scale) + jnp.asarray(action_bias)


if __name__ == "__main__":
    # Small shapes consistent with the module: state (B, num_inputs).
    B, num_inputs, num_actions, hidden_dim = 2, 16, 8, 32

    key = jax.random.PRNGKey(0)
    k_state, k_params, k_big = jax.random.split(key, 3)

    state = jax.random.normal(k_state, (B, num_inputs), jnp.float32)
    params = init_params(k_params, num_inputs, num_actions, hidden_dim)

    # --- action_space=None (scalar identity scale/bias) ---------------------
    wslab, vslab, meta = pack_params(params)
    mean = jax.block_until_ready(
        deterministic_policy_forward(state, wslab, vslab, meta))
    ref = _reference_forward(state, params)
    assert mean.shape == (B, num_actions)
    assert jnp.allclose(mean, ref, atol=3e-2), float(jnp.abs(mean - ref).max())

    # --- per-action-dim action_scale / action_bias (action_space given) -----
    scale = np.linspace(0.5, 2.0, num_actions).astype(np.float32)
    bias = np.linspace(-0.3, 0.3, num_actions).astype(np.float32)
    wslab_a, vslab_a, meta_a = pack_params(params, scale, bias)
    mean_a = jax.block_until_ready(
        deterministic_policy_forward(state, wslab_a, vslab_a, meta_a))
    ref_a = _reference_forward(state, params, scale, bias)
    assert jnp.allclose(mean_a, ref_a, atol=6e-2), \
        float(jnp.abs(mean_a - ref_a).max())

    # --- larger batch: >=2 grid steps, shards across v7x TensorCores --------
    B_big = 1024
    state_big = jax.random.normal(k_big, (B_big, num_inputs), jnp.float32)
    ref_big = _reference_forward(state_big, params)

    mean_big = jax.block_until_ready(
        deterministic_policy_forward(state_big, wslab, vslab, meta))
    assert mean_big.shape == (B_big, num_actions)
    assert jnp.allclose(mean_big, ref_big, atol=3e-2)

    # Narrow (masked-vst) output variant — the v5e writeback alternative.
    mean_narrow = jax.block_until_ready(
        deterministic_policy_forward(state_big, wslab, vslab, meta,
                                     lane_dense_output=False))
    assert jnp.allclose(mean_narrow, ref_big, atol=3e-2)

    # TODO(synk): .sample() uses stateful torch noise.normal_() clamped to
    # [-0.25, 0.25]; only forward() is implemented as the kernel hot path.
    print("KERNEL_OK")
</pallas_src>

<mosaic_0001>
module attributes {stable_mosaic.version = 11 : i64} {
  func.func @policy_kernel(%arg0: i32, %arg1: memref<272x128xbf16, #tpu.memory_space<vmem>>, %arg2: memref<8x128xf32, #tpu.memory_space<vmem>>, %arg3: memref<2x16xf32, #tpu.memory_space<vmem>>, %arg4: memref<2x128xf32, #tpu.memory_space<vmem>>) attributes {dimension_semantics = [#tpu.dimension_semantics<parallel>], iteration_bounds = array<i64: 1>, scalar_prefetch = 0 : i64, scratch_operands = 0 : i64, tpu.core_type = #tpu.core_type<tc>, window_params = [{pipeline_mode = #tpu.pipeline_mode<synchronous>, transform_indices = @transform_0, window_bounds = array<i64: 272, 128>}, {pipeline_mode = #tpu.pipeline_mode<synchronous>, transform_indices = @transform_1, window_bounds = array<i64: 8, 128>}, {transform_indices = @transform_2, window_bounds = array<i64: 2, 16>}, {transform_indices = @transform_3, window_bounds = array<i64: 2, 128>}]} {
    %c0 = arith.constant 0 : index
    %c0_0 = arith.constant 0 : index
    %0 = vector.load %arg1[%c0, %c0_0] : memref<272x128xbf16, #tpu.memory_space<vmem>>, vector<16x128xbf16>
    %c16 = arith.constant 16 : index
    %c0_1 = arith.constant 0 : index
    %1 = vector.load %arg1[%c16, %c0_1] : memref<272x128xbf16, #tpu.memory_space<vmem>>, vector<128x128xbf16>
    %c144 = arith.constant 144 : index
    %c0_2 = arith.constant 0 : index
    %2 = vector.load %arg1[%c144, %c0_2] : memref<272x128xbf16, #tpu.memory_space<vmem>>, vector<128x128xbf16>
    %c0_3 = arith.constant 0 : index
    %c0_4 = arith.constant 0 : index
    %3 = vector.load %arg2[%c0_3, %c0_4] : memref<8x128xf32, #tpu.memory_space<vmem>>, vector<1x128xf32>
    %c1 = arith.constant 1 : index
    %c0_5 = arith.constant 0 : index
    %4 = vector.load %arg2[%c1, %c0_5] : memref<8x128xf32, #tpu.memory_space<vmem>>, vector<1x128xf32>
    %c2 = arith.constant 2 : index
    %c0_6 = arith.constant 0 : index
    %5 = vector.load %arg2[%c2, %c0_6] : memref<8x128xf32, #tpu.memory_space<vmem>>, vector<1x128xf32>
    %c0_7 = arith.constant 0 : index
    %c0_8 = arith.constant 0 : index
    %6 = vector.load %arg3[%c0_7, %c0_8] : memref<2x16xf32, #tpu.memory_space<vmem>>, vector<2x16xf32>
    %7 = arith.truncf %6 : vector<2x16xf32> to vector<2x16xbf16>
    %cst = arith.constant dense<0.000000e+00> : vector<2x128xf32>
    %8 = tpu.matmul %7, %0, %cst {dimension_numbers = #tpu.dot_dimension_numbers<[1], [0], [0], [1], [0, 0, 1, 1], [], []>} : vector<2x16xbf16>, vector<16x128xbf16>, vector<2x128xf32> -> vector<2x128xf32>
    %9 = vector.broadcast %3 : vector<1x128xf32> to vector<2x128xf32>
    %10 = arith.addf %8, %9 : vector<2x128xf32>
    %cst_9 = arith.constant 0.000000e+00 : f32
    %11 = vector.broadcast %cst_9 : f32 to vector<2x128xf32>
    %12 = arith.maximumf %10, %11 : vector<2x128xf32>
    %13 = arith.truncf %12 : vector<2x128xf32> to vector<2x128xbf16>
    %cst_10 = arith.constant dense<0.000000e+00> : vector<2x128xf32>
    %14 = tpu.matmul %13, %1, %cst_10 {dimension_numbers = #tpu.dot_dimension_numbers<[1], [0], [0], [1], [0, 0, 1, 1], [], []>} : vector<2x128xbf16>, vector<128x128xbf16>, vector<2x128xf32> -> vector<2x128xf32>
    %15 = vector.broadcast %4 : vector<1x128xf32> to vector<2x128xf32>
    %16 = arith.addf %14, %15 : vector<2x128xf32>
    %cst_11 = arith.constant 0.000000e+00 : f32
    %17 = vector.broadcast %cst_11 : f32 to vector<2x128xf32>
    %18 = arith.maximumf %16, %17 : vector<2x128xf32>
    %19 = arith.truncf %18 : vector<2x128xf32> to vector<2x128xbf16>
    %cst_12 = arith.constant dense<0.000000e+00> : vector<2x128xf32>
    %20 = tpu.matmul %19, %2, %cst_12 {dimension_numbers = #tpu.dot_dimension_numbers<[1], [0], [0], [1], [0, 0, 1, 1], [], []>} : vector<2x128xbf16>, vector<128x128xbf16>, vector<2x128xf32> -> vector<2x128xf32>
    %21 = vector.broadcast %5 : vector<1x128xf32> to vector<2x128xf32>
    %22 = arith.addf %20, %21 : vector<2x128xf32>
    %23 = math.tanh %22 : vector<2x128xf32>
    %c0_13 = arith.constant 0 : index
    %c0_14 = arith.constant 0 : index
    %24 = vector.load %arg4[%c0_13, %c0_14] : memref<2x128xf32, #tpu.memory_space<vmem>>, vector<2x128xf32>
    tpu.vector_store %arg4[%c0_13, %c0_14], %23 {strides = array<i32>} : memref<2x128xf32, #tpu.memory_space<vmem>>, vector<2x128xf32>,
    return
  }
  func.func @transform_0(%arg0: i32) -> (i32, i32) {
    %c0_i32 = arith.constant 0 : i32
    %c0_i32_0 = arith.constant 0 : i32
    %c0_i32_1 = arith.constant 0 : i32
    return %c0_i32, %c0_i32_0 : i32, i32
  }
  func.func @transform_1(%arg0: i32) -> (i32, i32) {
    %c0_i32 = arith.constant 0 : i32
    %c0_i32_0 = arith.constant 0 : i32
    %c0_i32_1 = arith.constant 0 : i32
    return %c0_i32, %c0_i32_0 : i32, i32
  }
  func.func @transform_2(%arg0: i32) -> (i32, i32) {
    %c0_i32 = arith.constant 0 : i32
    %c0_i32_0 = arith.constant 0 : i32
    return %arg0, %c0_i32 : i32, i32
  }
  func.func @transform_3(%arg0: i32) -> (i32, i32) {
    %c0_i32 = arith.constant 0 : i32
    %c0_i32_0 = arith.constant 0 : i32
    return %arg0, %c0_i32 : i32, i32
  }
}

</mosaic_0001>

<llo_original>
// kernel: tpu_custom_call.1
$region0: #{tpu_custom_call.1}
  #allocation0 [shape = 'u32[]', space=smem, size = 0x4, offset = 0x4, fixed_abs, tag = 'smem constant byte address 0x4 - core index']
  #allocation1 [shape = 'u32[72,128]{1,0:T(1,128)}', space=vmem, size = 0x9000, scoped, tag = 'internal scratch']
  %s0 = inlined_call_operand.hbm [shape: bf16[272,128], index: 0, kind: input, shape index: {}]
  %s1 = inlined_call_operand.hbm [shape: f32[8,128], index: 1, kind: input, shape index: {}]
  %s2 = inlined_call_operand.hbm [shape: f32[2,16], index: 2, kind: input, shape index: {}]
  %s3 = inlined_call_operand.hbm [shape: f32[2,128], index: 3, kind: output, shape index: {}]
  %s4 = sld [smem:[#allocation0]]
  $region34: #{tpu_custom_call.1} parent=0
    _
  %s6 = ssub.s32 1, %s4
  %s7 = scalar_select 0, %s6, %s4
  $region1: #{tpu_custom_call.1} parent=0
    #allocation2 [shape = 'u8[69632]{0}', space=vmem, size = 0x11000, scoped, tag = 'input window, operand 0, single buffered']
    #allocation3 [shape = 's32[1]{0}', space=sflag, size = 0x4, scoped, tag = 'scoped memory for tpu_custom_call.1']
    #allocation4 [shape = 's32[1]{0}', space=sflag, size = 0x4, scoped, tag = 'scoped memory for tpu_custom_call.1']
    #allocation5 [shape = 'u8[4096]{0}', space=vmem, size = 0x1000, scoped, tag = 'input window, operand 1, single buffered']
    #allocation6 [shape = 's32[1]{0}', space=sflag, size = 0x4, scoped, tag = 'scoped memory for tpu_custom_call.1']
    #allocation7 [shape = 'u8[1024]{0}', space=vmem, size = 0x400, scoped, tag = 'input window, operand 2, single buffered']
    #allocation8 [shape = 'u8[1024]{0}', space=vmem, size = 0x400, scoped, tag = 'output window, operand 0, single buffered']
    %8 = vsyncpa [#allocation3], 0
    %9 = vsyncpa [#allocation6], 0
    %10 = vsyncpa [#allocation4], 0
    // Predicated region
    $region2: #{tpu_custom_call.1} parent=1 // pred_check
      _
    $region3: #{tpu_custom_call.1} parent=1 // pred_check_branch
      %12 = sbr.rel (0) target = $region5
    $region4: #{tpu_custom_call.1} parent=1 // pred_region
      %14 = vsyncadd [#allocation3], 0
      %s15 = sshll.u32 %s0, 4
      %s16 = int_to_ptr.hbm [resolvable:$true] %s15
      %s17 = sshll.u32 [#allocation2], 4
      %s18 = int_to_ptr.vmem [resolvable:$true] %s17
      %23 = dma.hbm_to_vmem [thread:$0]  %s16, 2176, %s18, [#allocation3], 64, 64, 4
    $region5: #{tpu_custom_call.1} parent=1 // pred_fallthru
      _
    // Predicated region
    $region6: #{tpu_custom_call.1} parent=1 // pred_check
      _
    $region7: #{tpu_custom_call.1} parent=1 // pred_check_branch
      %25 = sbr.rel (0) target = $region9
    $region8: #{tpu_custom_call.1} parent=1 // pred_region
      %27 = vsyncadd [#allocation6], 0
      %s29 = sshll.u32 %s1, 4
      %s30 = int_to_ptr.hbm [resolvable:$true] %s29
      %s31 = sshll.u32 [#allocation5], 4
      %s32 = int_to_ptr.vmem [resolvable:$true] %s31
      %34 = dma.hbm_to_vmem [thread:$0]  %s30, 128, %s32, [#allocation6]
    $region9: #{tpu_custom_call.1} parent=1 // pred_fallthru
      _
    // Predicated region
    $region10: #{tpu_custom_call.1} parent=1 // pred_check
      _
    $region11: #{tpu_custom_call.1} parent=1 // pred_check_branch
      %36 = sbr.rel (0) target = $region13
    $region12: #{tpu_custom_call.1} parent=1 // pred_region
      %38 = vsyncadd [#allocation6], 0
      %s40 = sshll.u32 %s2, 4
      %s41 = int_to_ptr.hbm [resolvable:$true] %s40
      %s42 = sshll.u32 [#allocation7], 4
      %s43 = int_to_ptr.vmem [resolvable:$true] %s42
      %45 = dma.hbm_to_vmem [thread:$0]  %s41, 32, %s43, [#allocation6]
    $region13: #{tpu_custom_call.1} parent=1 // pred_fallthru
      _
    // Predicated region
    $region14: #{tpu_custom_call.1} parent=1 // pred_check
      _
    $region15: #{tpu_custom_call.1} parent=1 // pred_check_branch
      %47 = sbr.rel (0) target = $region17
    $region16: #{tpu_custom_call.1} parent=1 // pred_region
      %49 = dma.done [#allocation3], 2176
    $region17: #{tpu_custom_call.1} parent=1 // pred_fallthru
      _
    // Predicated region
    $region18: #{tpu_custom_call.1} parent=1 // pred_check
      _
    $region19: #{tpu_custom_call.1} parent=1 // pred_check_branch
      %51 = sbr.rel (0) target = $region21
    $region20: #{tpu_custom_call.1} parent=1 // pred_region
      %53 = dma.done [#allocation6], 128
    $region21: #{tpu_custom_call.1} parent=1 // pred_fallthru
      _
    // Predicated region
    $region22: #{tpu_custom_call.1} parent=1 // pred_check
      _
    $region23: #{tpu_custom_call.1} parent=1 // pred_check_branch
      %55 = sbr.rel (0) target = $region25
    $region24: #{tpu_custom_call.1} parent=1 // pred_region
      %57 = dma.done [#allocation6], 32
    $region25: #{tpu_custom_call.1} parent=1 // pred_fallthru
      _
    %v59 = vld [vmem:[#allocation2] sm:$0xf]
    %v60 = vld [vmem:[#allocation2 + $0x4] sm:$0xf]
    %v61 = vld [vmem:[#allocation2 + $0x8] sm:$0xf]
    %v62 = vld [vmem:[#allocation2 + $0xc] sm:$0xf]
    %v63 = vld [vmem:[#allocation2 + $0x10] sm:$0xf]
    %v64 = vld [vmem:[#allocation2 + $0x14] sm:$0xf]
    %v65 = vld [vmem:[#allocation2 + $0x18] sm:$0xf]
    %v66 = vld [vmem:[#allocation2 + $0x1c] sm:$0xf]
    %v67 = vld [vmem:[#allocation2 + $0x20] sm:$0xf]
    %v68 = vld [vmem:[#allocation2 + $0x24] sm:$0xf]
    %v69 = vld [vmem:[#allocation2 + $0x28] sm:$0xf]
    %v70 = vld [vmem:[#allocation2 + $0x2c] sm:$0xf]
    %v71 = vld [vmem:[#allocation2 + $0x30] sm:$0xf]
    %v72 = vld [vmem:[#allocation2 + $0x34] sm:$0xf]
    %v73 = vld [vmem:[#allocation2 + $0x38] sm:$0xf]
    %v74 = vld [vmem:[#allocation2 + $0x3c] sm:$0xf]
    %v75 = vld [vmem:[#allocation2 + $0x40] sm:$0xf]
    %v76 = vld [vmem:[#allocation2 + $0x44] sm:$0xf]
    %v77 = vld [vmem:[#allocation2 + $0x48] sm:$0xf]
    %v78 = vld [vmem:[#allocation2 + $0x4c] sm:$0xf]
    %v79 = vld [vmem:[#allocation2 + $0x50] sm:$0xf]
    %v80 = vld [vmem:[#allocation2 + $0x54] sm:$0xf]
    %v81 = vld [vmem:[#allocation2 + $0x58] sm:$0xf]
    %v82 = vld [vmem:[#allocation2 + $0x5c] sm:$0xf]
    %v83 = vld [vmem:[#allocation2 + $0x60] sm:$0xf]
    %v84 = vld [vmem:[#allocation2 + $0x64] sm:$0xf]
    %v85 = vld [vmem:[#allocation2 + $0x68] sm:$0xf]
    %v86 = vld [vmem:[#allocation2 + $0x6c] sm:$0xf]
    %v87 = vld [vmem:[#allocation2 + $0x70] sm:$0xf]
    %v88 = vld [vmem:[#allocation2 + $0x74] sm:$0xf]
    %v89 = vld [vmem:[#allocation2 + $0x78] sm:$0xf]
    %v90 = vld [vmem:[#allocation2 + $0x7c] sm:$0xf]
    %v91 = vld [vmem:[#allocation2 + $0x80] sm:$0xf]
    %v92 = vld [vmem:[#allocation2 + $0x84] sm:$0xf]
    %v93 = vld [vmem:[#allocation5] sm:$0x1]
    %v94 = vld [vmem:[#allocation5 + $0x1] sm:$0x1]
    %v95 = vld [vmem:[#allocation5 + $0x2] sm:$0x1]
    %v96 = vld [vmem:[#allocation7] sm:$0x3]
    %v97 = vpack.c.bf16 %v96, %v96
    %v98 = vperm.slane %v93, 0
    %v101 = vunpack.c.l.b16 %v59
    %v102 = vunpack.c.l.b16 %v60
    %v103 = vpack.c.b16 %v102, %v101
    %vm105 = vcmask 130048
    %v107 = vsel %vm105, %v97, 0
    %109 = vmatpush.bf16.msra.mxu0 0
    %110 = vmatpush.bf16.msra.mxu0 0
    %111 = vmatpush.bf16.msra.mxu0 0
    %112 = vmatpush.bf16.msra.mxu0 0
    %113 = vmatpush.bf16.msra.mxu0 0
    %114 = vmatpush.bf16.msra.mxu0 0
    %115 = vmatpush.bf16.msra.mxu0 0
    %116 = vmatpush.bf16.msra.mxu0 %v103
    %117 = vmatmul.bf16.gmra.mxu0 %v107
    %v118 = vpop.f32.mrf.mxu0
    %v119 = vadd.f32 %v98, %v118
    %v120 = vpop.f32.mrf.mxu0
    %121 = vdwg.mxu0
    %v122 = vmax.f32 %v119, 0.0
    %v123 = vpack.c.bf16 %v122, %v122
    %v124 = vperm.slane %v94, 0
    %v141 = vunpack.c.l.b16 %v61
    %v142 = vunpack.c.l.b16 %v62
    %v143 = vunpack.c.l.b16 %v63
    %v144 = vunpack.c.l.b16 %v64
    %v145 = vunpack.c.l.b16 %v65
    %v146 = vunpack.c.l.b16 %v66
    %v147 = vunpack.c.l.b16 %v67
    %v148 = vunpack.c.l.b16 %v68
    %v149 = vunpack.c.l.b16 %v69
    %v150 = vunpack.c.l.b16 %v70
    %v151 = vunpack.c.l.b16 %v71
    %v152 = vunpack.c.l.b16 %v72
    %v153 = vunpack.c.l.b16 %v73
    %v154 = vunpack.c.l.b16 %v74
    %v155 = vunpack.c.l.b16 %v75
    %v156 = vunpack.c.l.b16 %v76
    %v157 = vpack.c.b16 %v142, %v141
    %v158 = vpack.c.b16 %v144, %v143
    %v159 = vpack.c.b16 %v146, %v145
    %v160 = vpack.c.b16 %v148, %v147
    %v161 = vpack.c.b16 %v150, %v149
    %v162 = vpack.c.b16 %v152, %v151
    %v163 = vpack.c.b16 %v154, %v153
    %v164 = vpack.c.b16 %v156, %v155
    %173 = vmatpush.bf16.msra.mxu0 %v164
    %174 = vmatpush.bf16.msra.mxu0 %v163
    %175 = vmatpush.bf16.msra.mxu0 %v162
    %176 = vmatpush.bf16.msra.mxu0 %v161
    %177 = vmatpush.bf16.msra.mxu0 %v160
    %178 = vmatpush.bf16.msra.mxu0 %v159
    %179 = vmatpush.bf16.msra.mxu0 %v158
    %180 = vmatpush.bf16.msra.mxu0 %v157
    %181 = vmatmul.bf16.gmra.mxu0 %v123
    %v182 = vpop.f32.mrf.mxu0
    %v183 = vadd.f32 %v124, %v182
    %v184 = vpop.f32.mrf.mxu0
    %185 = vdwg.mxu0
    %v186 = vmax.f32 %v183, 0.0
    %v187 = vpack.c.bf16 %v186, %v186
    %v188 = vperm.slane %v95, 0
    %v205 = vunpack.c.l.b16 %v77
    %v206 = vunpack.c.l.b16 %v78
    %v207 = vunpack.c.l.b16 %v79
    %v208 = vunpack.c.l.b16 %v80
    %v209 = vunpack.c.l.b16 %v81
    %v210 = vunpack.c.l.b16 %v82
    %v211 = vunpack.c.l.b16 %v83
    %v212 = vunpack.c.l.b16 %v84
    %v213 = vunpack.c.l.b16 %v85
    %v214 = vunpack.c.l.b16 %v86
    %v215 = vunpack.c.l.b16 %v87
    %v216 = vunpack.c.l.b16 %v88
    %v217 = vunpack.c.l.b16 %v89
    %v218 = vunpack.c.l.b16 %v90
    %v219 = vunpack.c.l.b16 %v91
    %v220 = vunpack.c.l.b16 %v92
    %v221 = vpack.c.b16 %v206, %v205
    %v222 = vpack.c.b16 %v208, %v207
    %v223 = vpack.c.b16 %v210, %v209
    %v224 = vpack.c.b16 %v212, %v211
    %v225 = vpack.c.b16 %v214, %v213
    %v226 = vpack.c.b16 %v216, %v215
    %v227 = vpack.c.b16 %v218, %v217
    %v228 = vpack.c.b16 %v220, %v219
    %237 = vmatpush.bf16.msra.mxu0 %v228
    %238 = vmatpush.bf16.msra.mxu0 %v227
    %239 = vmatpush.bf16.msra.mxu0 %v226
    %240 = vmatpush.bf16.msra.mxu0 %v225
    %241 = vmatpush.bf16.msra.mxu0 %v224
    %242 = vmatpush.bf16.msra.mxu0 %v223
    %243 = vmatpush.bf16.msra.mxu0 %v222
    %244 = vmatpush.bf16.msra.mxu0 %v221
    %245 = vmatmul.bf16.gmra.mxu0 %v187
    %v246 = vpop.f32.mrf.mxu0
    %v247 = vadd.f32 %v188, %v246
    %v248 = vpop.f32.mrf.mxu0
    %249 = vdwg.mxu0
    %v250 = vtanh.pop %v247
    %251 = vst [vmem:[#allocation8] sm:$0x3] %v250
    // Predicated region
    $region26: #{tpu_custom_call.1} parent=1 // pred_check
      _
    $region27: #{tpu_custom_call.1} parent=1 // pred_check_branch
      %253 = sbr.rel (0) target = $region29
    $region28: #{tpu_custom_call.1} parent=1 // pred_region
      %255 = vsyncadd [#allocation4], 0
      %s257 = sshll.u32 [#allocation8], 4
      %s258 = int_to_ptr.vmem [resolvable:$true] %s257
      %s259 = sshll.u32 %s3, 4
      %s260 = int_to_ptr.hbm [resolvable:$true] %s259
      %262 = dma.vmem_to_hbm [thread:$0]  %s258, 32, %s260, [#allocation4]
    $region29: #{tpu_custom_call.1} parent=1 // pred_fallthru
      _
    // Predicated region
    $region30: #{tpu_custom_call.1} parent=1 // pred_check
      _
    $region31: #{tpu_custom_call.1} parent=1 // pred_check_branch
      %264 = sbr.rel (0) target = $region33
    $region32: #{tpu_custom_call.1} parent=1 // pred_region
      %266 = dma.done [#allocation4], 32
    $region33: #{tpu_custom_call.1} parent=1 // pred_fallthru
      _
    %267 = vsyncpa [#allocation3], 1
    %268 = vsyncpa [#allocation6], 1
    %269 = vsyncpa [#allocation4], 1

</llo_original>
